<compile_context>
chip_gen: v7x
topology: tpu7x:2x2x1
jax: 0.10.0
libtpu: 0.0.40
codegen_flags: <defaults>
</compile_context>

<pallas_src>
import functools

import jax
import jax.numpy as jnp
from jax.experimental import pallas as pl
from jax.experimental.pallas import tpu as pltpu


def _round_up(x, m):
    return -(-x // m) * m


def _num_tensorcores():
    """Best-effort TensorCores-per-device (v7x has 2; v5e/v6e have 1)."""
    try:
        info = pltpu.get_tpu_info()
        for name in ("num_cores", "tensorcores_per_chip", "num_tensorcores",
                     "cores_per_chip", "core_count"):
            n = getattr(info, name, None)
            if n is not None:
                n = int(n)
                if n > 0:
                    return n
    except Exception:
        pass
    try:
        if "v7" in jax.devices()[0].device_kind.lower():
            return 2
    except Exception:
        pass
    return 1


def _pick_batch_tile(B, rows_per_image, num_cores, max_bt_vmem,
                     rows_per_core_target=256):
    """Images per grid step.

    Default: whole batch in ONE step (on 1-TC chips extra steps are a serial
    loop: 2x fixed overhead, smaller MXU M).  Split only when (a) VMEM forces
    it, or (b) the chip has >= 2 TensorCores AND each step still feeds the MXU
    with >= rows_per_core_target lane-dense rows.
    """
    divisors = [d for d in range(1, B + 1) if B % d == 0]
    fitting = [d for d in divisors if d <= max_bt_vmem] or [1]
    bt = max(fitting)                         # one grid step if it fits VMEM
    if num_cores >= 2:
        split = [d for d in fitting
                 if B // d >= num_cores and d * rows_per_image >= rows_per_core_target]
        if split:
            bt = max(split)
    return bt


def _conv_block_kernel(x_ref, m_ref, b_ref, o_ref, *, Bt, H, KH, row_len,
                       out_len_pad):
    """One batch tile per grid step.

    x_ref : (Bt, Hp, row_len)           zero-padded, ReLU'd, mxu-dtype rows
    m_ref : (KH*row_len, out_len_pad)   banded im2col weight matrix (resident)
    b_ref : (1, out_len_pad)            bias pre-tiled to the output lane layout
    o_ref : (Bt, H, out_len_pad)        lane-dense output (unmasked stores)
    """
    xv = x_ref[...]
    # "im2col" over the KH row taps only: concatenate KH row-shifted views on
    # the lane axis (row_len is a multiple of 128 in the fast path, so the
    # concat is vreg-aligned).  KW/Cin taps live inside the banded weights.
    cols = jnp.concatenate([xv[:, kh:kh + H, :] for kh in range(KH)], axis=-1)
    cols = cols.reshape(Bt * H, KH * row_len)

    # Single MXU matmul with f32 accumulation, then one unmasked VPU bias add.
    acc = jnp.dot(cols, m_ref[...], preferred_element_type=jnp.float32)
    acc = acc + b_ref[...]

    o_ref[...] = acc.reshape(Bt, H, out_len_pad).astype(o_ref.dtype)


def _build_banded_weights(w_oihw, Wp_pad, W, out_len_pad, mxu_dtype):
    """(Cout, Cin, KH, KW) -> banded (KH*Wp_pad*Cin, out_len_pad) matmul matrix.

    M[(kh*Wp_pad + wp)*Cin + ci, w*Cout + co] = w[co, ci, kh, wp - w]
    when 0 <= wp - w < KW, else 0.  Rows for the right-side lane padding
    (wp >= Wp) and columns >= W*Cout are all zero, so padded lanes never leak
    into (or out of) the real output.
    """
    Cout, Cin, KH, KW = w_oihw.shape
    w_hwio = jnp.transpose(w_oihw, (2, 3, 1, 0))                  # (KH, KW, Cin, Cout)
    kw = jnp.arange(Wp_pad)[:, None] - jnp.arange(W)[None, :]     # (Wp_pad, W)
    valid = (kw >= 0) & (kw < KW)
    m = w_hwio[:, jnp.clip(kw, 0, KW - 1), :, :]                  # (KH, Wp_pad, W, Cin, Cout)
    m = jnp.where(valid[None, :, :, None, None], m, 0.0)
    m = jnp.transpose(m, (0, 1, 3, 2, 4))                         # (KH, Wp_pad, Cin, W, Cout)
    m = m.reshape(KH * Wp_pad * Cin, W * Cout)
    if out_len_pad > W * Cout:
        m = jnp.pad(m, ((0, 0), (0, out_len_pad - W * Cout)))
    return m.astype(mxu_dtype)


@functools.partial(jax.jit, static_argnames=("mxu_dtype",))
def conv_block_forward(x_nchw, w_oihw, bias, *, mxu_dtype=jnp.bfloat16):
    """ConvBlock.forward: Conv2d(ReLU(Identity(x))), padding = kernel_size // 2."""
    B, Cin, H, W = x_nchw.shape
    Cout, Cin_w, KH, KW = w_oihw.shape
    assert Cin == Cin_w and KH == KW
    pad = KH // 2
    Hp, Wp = H + 2 * pad, W + 2 * pad

    # ---- lane geometry ------------------------------------------------------
    if 128 % Cin == 0:
        Wp_pad = _round_up(Wp * Cin, 128) // Cin      # 128-lane-aligned rows
    elif Cin % 128 == 0:
        Wp_pad = Wp                                   # rows already aligned
    else:
        # Explicit fallback: rows are NOT a multiple of 128 lanes.  Still
        # correct, but input loads and the in-kernel concat fall off the
        # unmasked fast path.
        # TODO(synk): pad Wp to a multiple of 128 // gcd(Cin, 128) when the
        # extra structural zeros in the contraction are worth the alignment.
        Wp_pad = Wp
    row_len = Wp_pad * Cin
    out_len = W * Cout
    out_len_pad = _round_up(out_len, 128)             # lane-dense (unmasked) stores

    # ---- layout pre-pass (single fused HBM copy under jit) ------------------
    # NCHW -> NHWC, ReLU (activation; Normalization is Identity, and ReLU
    # commutes with the zero halo pad and the bf16 cast), zero-pad the halo +
    # right-side lane padding, flatten (W, Cin) onto lanes, cast to the MXU
    # input dtype.  Doing ReLU + the cast here is free (fused into the copy)
    # and halves both the pre-pass HBM write and the per-step input DMA.
    # TODO(synk): drop this pre-pass entirely (accept NHWC/lane-dense input at
    # the model boundary, or do masked halo handling in-kernel).
    x_nhwc = jnp.transpose(x_nchw, (0, 2, 3, 1))
    x_act = jnp.maximum(x_nhwc, 0.0)
    x_pad = jnp.pad(x_act, ((0, 0), (pad, pad), (pad, Wp_pad - W - pad), (0, 0)))
    x_slab = x_pad.reshape(B, Hp, row_len).astype(mxu_dtype)

    m = _build_banded_weights(w_oihw, Wp_pad, W, out_len_pad, mxu_dtype)
    b_lane = jnp.pad(jnp.tile(bias, W), (0, out_len_pad - out_len))
    b_lane = b_lane.reshape(1, out_len_pad).astype(jnp.float32)

    # ---- batch tiling + VMEM budget -----------------------------------------
    in_bytes = jnp.dtype(mxu_dtype).itemsize
    out_bytes = jnp.dtype(x_nchw.dtype).itemsize
    weight_bytes = KH * row_len * out_len_pad * in_bytes
    bias_bytes = out_len_pad * 4
    # Per image: double-buffered in/out blocks + in-kernel im2col slab + f32 acc.
    per_image = (2 * Hp * row_len * in_bytes
                 + 2 * H * out_len_pad * out_bytes
                 + H * KH * row_len * in_bytes
                 + H * out_len_pad * 4)
    budget = 40 << 20        # conservative across v5e/v6e/v7x (v7x: 64 MiB phys)
    # TODO(synk): when weight_bytes exceeds ~budget//2 (large W*Cin*Cout), tile
    # the banded weight over the output-column axis with a second grid dim.
    max_bt_vmem = max(1, (budget - 2 * (weight_bytes + bias_bytes)) // per_image)

    Bt = _pick_batch_tile(B, rows_per_image=H, num_cores=_num_tensorcores(),
                          max_bt_vmem=max_bt_vmem)
    grid = (B // Bt,)

    footprint = 2 * (weight_bytes + bias_bytes) + Bt * per_image
    vmem_limit = int(min(max(2 * footprint, 16 << 20), 48 << 20))

    kernel = functools.partial(
        _conv_block_kernel, Bt=Bt, H=H, KH=KH,
        row_len=row_len, out_len_pad=out_len_pad)

    out_slab = pl.pallas_call(
        kernel,
        out_shape=jax.ShapeDtypeStruct((B, H, out_len_pad), x_nchw.dtype),
        grid=grid,
        in_specs=[
            pl.BlockSpec((Bt, Hp, row_len), lambda b: (b, 0, 0)),
            pl.BlockSpec((KH * row_len, out_len_pad), lambda b: (0, 0)),  # resident weights
            pl.BlockSpec((1, out_len_pad), lambda b: (0, 0)),             # resident bias
        ],
        out_specs=pl.BlockSpec((Bt, H, out_len_pad), lambda b: (b, 0, 0)),
        compiler_params=pltpu.CompilerParams(
            dimension_semantics=("parallel",),
            vmem_limit_bytes=vmem_limit),
    )(x_slab, m, b_lane)

    # Drop the zero output-lane padding, back to PyTorch's NCHW convention.
    out = out_slab[..., :out_len].reshape(B, H, W, Cout)
    return jnp.transpose(out, (0, 3, 1, 2))


if __name__ == "__main__":
    # ConvBlock(in_chan=4, out_chan=8, Conv=nn.Conv2d, kernel_size=5) on a
    # small deterministic batch.
    B, Cin, H, W = 2, 4, 16, 16
    Cout, K = 8, 5

    key = jax.random.PRNGKey(0)
    kx, kw, kb = jax.random.split(key, 3)
    x = jax.random.normal(kx, (B, Cin, H, W), dtype=jnp.float32)
    # Deterministic synthetic parameters (the module's reset_parameters uses a
    # random init; the exact distribution is irrelevant for kernel semantics).
    w = 0.1 * jax.random.normal(kw, (Cout, Cin, K, K), dtype=jnp.float32)
    b = 0.1 * jax.random.normal(kb, (Cout,), dtype=jnp.float32)

    y = conv_block_forward(x, w, b)
    y = jax.block_until_ready(y)

    # Reference: ReLU -> Conv2d (SAME padding) in plain JAX/XLA, f32.
    y_ref = jax.lax.conv_general_dilated(
        jnp.maximum(x, 0.0), w, window_strides=(1, 1), padding="SAME",
        dimension_numbers=("NCHW", "OIHW", "NCHW"),
        precision=jax.lax.Precision.HIGHEST)
    y_ref = y_ref + b.reshape(1, Cout, 1, 1)

    assert y.shape == (B, Cout, H, W)
    # bf16 MXU inputs with f32 accumulation -> loosen tolerance vs the f32 ref.
    assert jnp.allclose(y, y_ref, atol=3e-2, rtol=3e-2), \
        float(jnp.max(jnp.abs(y - y_ref)))
    print("KERNEL_OK")
</pallas_src>

<mosaic_0001>
module attributes {stable_mosaic.version = 11 : i64} {
  func.func @_conv_block_kernel(%arg0: i32, %arg1: memref<2x20x128xbf16, #tpu.memory_space<vmem>>, %arg2: memref<640x128xbf16, #tpu.memory_space<vmem>>, %arg3: memref<1x128xf32, #tpu.memory_space<vmem>>, %arg4: memref<2x16x128xf32, #tpu.memory_space<vmem>>) attributes {dimension_semantics = [#tpu.dimension_semantics<parallel>], iteration_bounds = array<i64: 1>, scalar_prefetch = 0 : i64, scratch_operands = 0 : i64, tpu.core_type = #tpu.core_type<tc>, window_params = [{transform_indices = @transform_0, window_bounds = array<i64: 2, 20, 128>}, {pipeline_mode = #tpu.pipeline_mode<synchronous>, transform_indices = @transform_1, window_bounds = array<i64: 640, 128>}, {pipeline_mode = #tpu.pipeline_mode<synchronous>, transform_indices = @transform_2, window_bounds = array<i64: 1, 128>}, {transform_indices = @transform_3, window_bounds = array<i64: 2, 16, 128>}]} {
    %c0 = arith.constant 0 : index
    %c0_0 = arith.constant 0 : index
    %c0_1 = arith.constant 0 : index
    %0 = vector.load %arg1[%c0, %c0_0, %c0_1] : memref<2x20x128xbf16, #tpu.memory_space<vmem>>, vector<2x20x128xbf16>
    %1 = vector.extract_strided_slice %0 {offsets = [0, 0, 0], sizes = [2, 16, 128], strides = [1, 1, 1]} : vector<2x20x128xbf16> to vector<2x16x128xbf16>
    %2 = vector.extract_strided_slice %0 {offsets = [0, 1, 0], sizes = [2, 16, 128], strides = [1, 1, 1]} : vector<2x20x128xbf16> to vector<2x16x128xbf16>
    %3 = vector.extract_strided_slice %0 {offsets = [0, 2, 0], sizes = [2, 16, 128], strides = [1, 1, 1]} : vector<2x20x128xbf16> to vector<2x16x128xbf16>
    %4 = vector.extract_strided_slice %0 {offsets = [0, 3, 0], sizes = [2, 16, 128], strides = [1, 1, 1]} : vector<2x20x128xbf16> to vector<2x16x128xbf16>
    %5 = vector.extract_strided_slice %0 {offsets = [0, 4, 0], sizes = [2, 16, 128], strides = [1, 1, 1]} : vector<2x20x128xbf16> to vector<2x16x128xbf16>
    %6 = tpu.concatenate %1, %2, %3, %4, %5 in 2 : vector<2x16x128xbf16>, vector<2x16x128xbf16>, vector<2x16x128xbf16>, vector<2x16x128xbf16>, vector<2x16x128xbf16> -> vector<2x16x640xbf16>
    %7 = vector.shape_cast %6 : vector<2x16x640xbf16> to vector<32x640xbf16>
    %c0_2 = arith.constant 0 : index
    %c0_3 = arith.constant 0 : index
    %8 = vector.load %arg2[%c0_2, %c0_3] : memref<640x128xbf16, #tpu.memory_space<vmem>>, vector<640x128xbf16>
    %cst = arith.constant dense<0.000000e+00> : vector<32x128xf32>
    %9 = tpu.matmul %7, %8, %cst {dimension_numbers = #tpu.dot_dimension_numbers<[1], [0], [0], [1], [0, 0, 1, 1], [], []>} : vector<32x640xbf16>, vector<640x128xbf16>, vector<32x128xf32> -> vector<32x128xf32>
    %c0_4 = arith.constant 0 : index
    %c0_5 = arith.constant 0 : index
    %10 = vector.load %arg3[%c0_4, %c0_5] : memref<1x128xf32, #tpu.memory_space<vmem>>, vector<1x128xf32>
    %11 = vector.broadcast %10 : vector<1x128xf32> to vector<32x128xf32>
    %12 = arith.addf %9, %11 : vector<32x128xf32>
    %13 = vector.shape_cast %12 : vector<32x128xf32> to vector<2x16x128xf32>
    %c0_6 = arith.constant 0 : index
    %c0_7 = arith.constant 0 : index
    %c0_8 = arith.constant 0 : index
    %14 = vector.load %arg4[%c0_6, %c0_7, %c0_8] : memref<2x16x128xf32, #tpu.memory_space<vmem>>, vector<2x16x128xf32>
    tpu.vector_store %arg4[%c0_6, %c0_7, %c0_8], %13 {strides = array<i32>} : memref<2x16x128xf32, #tpu.memory_space<vmem>>, vector<2x16x128xf32>,
    return
  }
  func.func @transform_0(%arg0: i32) -> (i32, i32, i32) {
    %c0_i32 = arith.constant 0 : i32
    %c0_i32_0 = arith.constant 0 : i32
    %c0_i32_1 = arith.constant 0 : i32
    return %arg0, %c0_i32, %c0_i32_0 : i32, i32, i32
  }
  func.func @transform_1(%arg0: i32) -> (i32, i32) {
    %c0_i32 = arith.constant 0 : i32
    %c0_i32_0 = arith.constant 0 : i32
    %c0_i32_1 = arith.constant 0 : i32
    return %c0_i32, %c0_i32_0 : i32, i32
  }
  func.func @transform_2(%arg0: i32) -> (i32, i32) {
    %c0_i32 = arith.constant 0 : i32
    %c0_i32_0 = arith.constant 0 : i32
    %c0_i32_1 = arith.constant 0 : i32
    return %c0_i32, %c0_i32_0 : i32, i32
  }
  func.func @transform_3(%arg0: i32) -> (i32, i32, i32) {
    %c0_i32 = arith.constant 0 : i32
    %c0_i32_0 = arith.constant 0 : i32
    %c0_i32_1 = arith.constant 0 : i32
    return %arg0, %c0_i32, %c0_i32_0 : i32, i32, i32
  }
}

</mosaic_0001>

<llo_original>
// kernel: tile.8
$region0: #{tile.8}
  #allocation0 [shape = 's32[1]{0}', space=sflag, size = 0x4, scoped, tag = 'scoped memory for tile.8']
  %s0 = inlined_call_operand.vmem [shape: f32[8], index: 0, kind: input, shape index: {}]
  %s1 = inlined_call_operand.vmem [shape: f32[16,8], index: 1, kind: output, shape index: {}]
  // Predicated region
  $region2: #{tile.8} parent=0 // pred_check
    _
  $region3: #{tile.8} parent=0 // pred_check_branch
    %3 = sbr.rel (0) target = $region5
  $region4: #{tile.8} parent=0 // pred_region
    _
  $region5: #{tile.8} parent=0 // pred_fallthru
    _
  %v4 = vld [vmem:[%s0] ss:$0 sm:$0xff]
  %5 = vst [vmem:[%s1] sm:$0xff] %v4
  %s6 = scalar_lea.vmem %s1, 8
  %7 = vst [vmem:[%s6] sm:$0xff] %v4

// kernel: conv_block_forward.1
$region0: #{conv_block_forward.1}
  #allocation0 [shape = 'u32[]', space=smem, size = 0x4, offset = 0x4, fixed_abs, tag = 'smem constant byte address 0x4 - core index']
  #allocation1 [shape = 'u32[144,128]{1,0:T(1,128)}', space=vmem, size = 0x12000, scoped, tag = 'internal scratch']
  %s0 = inlined_call_operand.vmem [shape: bf16[2,20,128], index: 0, kind: input, shape index: {}]
  %s1 = inlined_call_operand.vmem [shape: bf16[640,128], index: 1, kind: input, shape index: {}]
  %s2 = inlined_call_operand.vmem [shape: f32[1,128], index: 2, kind: input, shape index: {}]
  %s3 = inlined_call_operand.vmem [shape: f32[2,16,128], index: 3, kind: output, shape index: {}]
  %s4 = sld [smem:[#allocation0]]
  $region22: #{conv_block_forward.1} parent=0
    _
  %s6 = ssub.s32 1, %s4
  %s7 = scalar_select 0, %s6, %s4
  // Predicated region
  $region2: #{conv_block_forward.1} parent=0 // pred_check
    _
  $region3: #{conv_block_forward.1} parent=0 // pred_check_branch
    %9 = sbr.rel (0) target = $region5
  $region4: #{conv_block_forward.1} parent=0 // pred_region
    _
  $region5: #{conv_block_forward.1} parent=0 // pred_fallthru
    _
  // Predicated region
  $region6: #{conv_block_forward.1} parent=0 // pred_check
    _
  $region7: #{conv_block_forward.1} parent=0 // pred_check_branch
    %11 = sbr.rel (0) target = $region9
  $region8: #{conv_block_forward.1} parent=0 // pred_region
    _
  $region9: #{conv_block_forward.1} parent=0 // pred_fallthru
    _
  // Predicated region
  $region10: #{conv_block_forward.1} parent=0 // pred_check
    _
  $region11: #{conv_block_forward.1} parent=0 // pred_check_branch
    %13 = sbr.rel (0) target = $region13
  $region12: #{conv_block_forward.1} parent=0 // pred_region
    _
  $region13: #{conv_block_forward.1} parent=0 // pred_fallthru
    _
  %v15 = vld [vmem:[%s0] sm:$0xf]
  %v16 = vld [vmem:[%s0 + $0x4] sm:$0xf]
  %v17 = vld [vmem:[%s0 + $0x8] sm:$0x3]
  %v18 = vld [vmem:[%s0 + $0xc] sm:$0xf]
  %v19 = vld [vmem:[%s0 + $0x10] sm:$0xf]
  %v20 = vld [vmem:[%s0 + $0x14] sm:$0x3]
  %v25 = vunpack.c.l.b16 %v15
  %v26 = vunpack.c.l.b16 %v16
  %v27 = vunpack.c.l.b16 %v18
  %v28 = vunpack.c.l.b16 %v19
  %v29 = vpack.c.b16 %v26, %v25
  %v30 = vpack.c.b16 %v28, %v27
  %v35 = vunpack.c.l.b16 %v17
  %v36 = vunpack.c.l.b16 %v20
  %v37 = vpack.c.b16 %v35, %v35
  %v38 = vpack.c.b16 %v36, %v36
  %vm39 = vsmask.f32 7424
  %v41 = vshrl.u32 %v29, 16
  %v43 = vshll.u32 %v29, 16
  %v45 = vrot.slane %v43, 1
  %v46 = vor.u32 %v41, %v45
  %v48 = vshll.u32 %v37, 16
  %v50 = vrot.slane %v48, 1
  %v51 = vsel %vm39, %v46, %v50
  %v53 = vshrl.u32 %v30, 16
  %v55 = vshll.u32 %v30, 16
  %v57 = vrot.slane %v55, 1
  %v58 = vor.u32 %v53, %v57
  %v60 = vshll.u32 %v38, 16
  %v62 = vrot.slane %v60, 1
  %v63 = vsel %vm39, %v58, %v62
  %vm66 = vcmask 1046528
  %v67 = vrot.slane %v29, 1
  %v68 = vrot.slane %v37, 1
  %v69 = vsel %vm66, %v67, %v68
  %v70 = vrot.slane %v30, 1
  %v71 = vrot.slane %v38, 1
  %v72 = vsel %vm66, %v70, %v71
  %vm75 = vsmask.f32 6400
  %v76 = vrot.slane %v41, 1
  %v77 = vrot.slane %v43, 2
  %v78 = vor.u32 %v76, %v77
  %v79 = vshrl.u32 %v37, 16
  %v81 = vrot.slane %v79, 1
  %v82 = vrot.slane %v48, 2
  %v83 = vor.u32 %v81, %v82
  %v84 = vsel %vm75, %v78, %v83
  %v85 = vrot.slane %v53, 1
  %v86 = vrot.slane %v55, 2
  %v87 = vor.u32 %v85, %v86
  %v88 = vshrl.u32 %v38, 16
  %v90 = vrot.slane %v88, 1
  %v91 = vrot.slane %v60, 2
  %v92 = vor.u32 %v90, %v91
  %v93 = vsel %vm75, %v87, %v92
  %vm96 = vcmask 1045504
  %v97 = vrot.slane %v29, 2
  %v98 = vrot.slane %v37, 2
  %v99 = vsel %vm96, %v97, %v98
  %v100 = vrot.slane %v30, 2
  %v101 = vrot.slane %v38, 2
  %v102 = vsel %vm96, %v100, %v101
  %v105 = vld [vmem:[%s1] sm:$0xf]
  %v106 = vld [vmem:[%s1 + $0x4] sm:$0xf]
  %v107 = vld [vmem:[%s1 + $0x8] sm:$0xf]
  %v108 = vld [vmem:[%s1 + $0xc] sm:$0xf]
  %v109 = vld [vmem:[%s1 + $0x10] sm:$0xf]
  %v110 = vld [vmem:[%s1 + $0x14] sm:$0xf]
  %v111 = vld [vmem:[%s1 + $0x18] sm:$0xf]
  %v112 = vld [vmem:[%s1 + $0x1c] sm:$0xf]
  %v113 = vld [vmem:[%s1 + $0x20] sm:$0xf]
  %v114 = vld [vmem:[%s1 + $0x24] sm:$0xf]
  %v115 = vld [vmem:[%s1 + $0x28] sm:$0xf]
  %v116 = vld [vmem:[%s1 + $0x2c] sm:$0xf]
  %v117 = vld [vmem:[%s1 + $0x30] sm:$0xf]
  %v118 = vld [vmem:[%s1 + $0x34] sm:$0xf]
  %v119 = vld [vmem:[%s1 + $0x38] sm:$0xf]
  %v120 = vld [vmem:[%s1 + $0x3c] sm:$0xf]
  %v121 = vld [vmem:[%s1 + $0x40] sm:$0xf]
  %v122 = vld [vmem:[%s1 + $0x44] sm:$0xf]
  %v123 = vld [vmem:[%s1 + $0x48] sm:$0xf]
  %v124 = vld [vmem:[%s1 + $0x4c] sm:$0xf]
  %v125 = vld [vmem:[%s1 + $0x50] sm:$0xf]
  %v126 = vld [vmem:[%s1 + $0x54] sm:$0xf]
  %v127 = vld [vmem:[%s1 + $0x58] sm:$0xf]
  %v128 = vld [vmem:[%s1 + $0x5c] sm:$0xf]
  %v129 = vld [vmem:[%s1 + $0x60] sm:$0xf]
  %v130 = vld [vmem:[%s1 + $0x64] sm:$0xf]
  %v131 = vld [vmem:[%s1 + $0x68] sm:$0xf]
  %v132 = vld [vmem:[%s1 + $0x6c] sm:$0xf]
  %v133 = vld [vmem:[%s1 + $0x70] sm:$0xf]
  %v134 = vld [vmem:[%s1 + $0x74] sm:$0xf]
  %v135 = vld [vmem:[%s1 + $0x78] sm:$0xf]
  %v136 = vld [vmem:[%s1 + $0x7c] sm:$0xf]
  %v137 = vld [vmem:[%s1 + $0x80] sm:$0xf]
  %v138 = vld [vmem:[%s1 + $0x84] sm:$0xf]
  %v139 = vld [vmem:[%s1 + $0x88] sm:$0xf]
  %v140 = vld [vmem:[%s1 + $0x8c] sm:$0xf]
  %v141 = vld [vmem:[%s1 + $0x90] sm:$0xf]
  %v142 = vld [vmem:[%s1 + $0x94] sm:$0xf]
  %v143 = vld [vmem:[%s1 + $0x98] sm:$0xf]
  %v144 = vld [vmem:[%s1 + $0x9c] sm:$0xf]
  %v145 = vld [vmem:[%s1 + $0xa0] sm:$0xf]
  %v146 = vld [vmem:[%s1 + $0xa4] sm:$0xf]
  %v147 = vld [vmem:[%s1 + $0xa8] sm:$0xf]
  %v148 = vld [vmem:[%s1 + $0xac] sm:$0xf]
  %v149 = vld [vmem:[%s1 + $0xb0] sm:$0xf]
  %v150 = vld [vmem:[%s1 + $0xb4] sm:$0xf]
  %v151 = vld [vmem:[%s1 + $0xb8] sm:$0xf]
  %v152 = vld [vmem:[%s1 + $0xbc] sm:$0xf]
  %v153 = vld [vmem:[%s1 + $0xc0] sm:$0xf]
  %v154 = vld [vmem:[%s1 + $0xc4] sm:$0xf]
  %v155 = vld [vmem:[%s1 + $0xc8] sm:$0xf]
  %v156 = vld [vmem:[%s1 + $0xcc] sm:$0xf]
  %v157 = vld [vmem:[%s1 + $0xd0] sm:$0xf]
  %v158 = vld [vmem:[%s1 + $0xd4] sm:$0xf]
  %v159 = vld [vmem:[%s1 + $0xd8] sm:$0xf]
  %v160 = vld [vmem:[%s1 + $0xdc] sm:$0xf]
  %v161 = vld [vmem:[%s1 + $0xe0] sm:$0xf]
  %v162 = vld [vmem:[%s1 + $0xe4] sm:$0xf]
  %v163 = vld [vmem:[%s1 + $0xe8] sm:$0xf]
  %v164 = vld [vmem:[%s1 + $0xec] sm:$0xf]
  %v165 = vld [vmem:[%s1 + $0xf0] sm:$0xf]
  %v166 = vld [vmem:[%s1 + $0xf4] sm:$0xf]
  %v167 = vld [vmem:[%s1 + $0xf8] sm:$0xf]
  %v168 = vld [vmem:[%s1 + $0xfc] sm:$0xf]
  %v169 = vld [vmem:[%s1 + $0x100] sm:$0xf]
  %v170 = vld [vmem:[%s1 + $0x104] sm:$0xf]
  %v171 = vld [vmem:[%s1 + $0x108] sm:$0xf]
  %v172 = vld [vmem:[%s1 + $0x10c] sm:$0xf]
  %v173 = vld [vmem:[%s1 + $0x110] sm:$0xf]
  %v174 = vld [vmem:[%s1 + $0x114] sm:$0xf]
  %v175 = vld [vmem:[%s1 + $0x118] sm:$0xf]
  %v176 = vld [vmem:[%s1 + $0x11c] sm:$0xf]
  %v177 = vld [vmem:[%s1 + $0x120] sm:$0xf]
  %v178 = vld [vmem:[%s1 + $0x124] sm:$0xf]
  %v179 = vld [vmem:[%s1 + $0x128] sm:$0xf]
  %v180 = vld [vmem:[%s1 + $0x12c] sm:$0xf]
  %v181 = vld [vmem:[%s1 + $0x130] sm:$0xf]
  %v182 = vld [vmem:[%s1 + $0x134] sm:$0xf]
  %v183 = vld [vmem:[%s1 + $0x138] sm:$0xf]
  %v184 = vld [vmem:[%s1 + $0x13c] sm:$0xf]
  %v185 = vld [vmem:[%s2] sm:$0x1]
  %v187 = vlaneseq
  %v188 = vshrl.u32 %v187, 7
  %v189 = vsub.s32 0, %v188
  %v190 = vrot.slane %v185, %v189
  %v272 = vunpack.c.l.b16 %v105
  %v273 = vunpack.c.l.b16 %v106
  %v274 = vunpack.c.l.b16 %v107
  %v275 = vunpack.c.l.b16 %v108
  %v276 = vunpack.c.l.b16 %v109
  %v277 = vunpack.c.l.b16 %v110
  %v278 = vunpack.c.l.b16 %v111
  %v279 = vunpack.c.l.b16 %v112
  %v280 = vunpack.c.l.b16 %v113
  %v281 = vunpack.c.l.b16 %v114
  %v282 = vunpack.c.l.b16 %v115
  %v283 = vunpack.c.l.b16 %v116
  %v284 = vunpack.c.l.b16 %v117
  %v285 = vunpack.c.l.b16 %v118
  %v286 = vunpack.c.l.b16 %v119
  %v287 = vunpack.c.l.b16 %v120
  %v288 = vunpack.c.l.b16 %v121
  %v289 = vunpack.c.l.b16 %v122
  %v290 = vunpack.c.l.b16 %v123
  %v291 = vunpack.c.l.b16 %v124
  %v292 = vunpack.c.l.b16 %v125
  %v293 = vunpack.c.l.b16 %v126
  %v294 = vunpack.c.l.b16 %v127
  %v295 = vunpack.c.l.b16 %v128
  %v296 = vunpack.c.l.b16 %v129
  %v297 = vunpack.c.l.b16 %v130
  %v298 = vunpack.c.l.b16 %v131
  %v299 = vunpack.c.l.b16 %v132
  %v300 = vunpack.c.l.b16 %v133
  %v301 = vunpack.c.l.b16 %v134
  %v302 = vunpack.c.l.b16 %v135
  %v303 = vunpack.c.l.b16 %v136
  %v304 = vunpack.c.l.b16 %v137
  %v305 = vunpack.c.l.b16 %v138
  %v306 = vunpack.c.l.b16 %v139
  %v307 = vunpack.c.l.b16 %v140
  %v308 = vunpack.c.l.b16 %v141
  %v309 = vunpack.c.l.b16 %v142
  %v310 = vunpack.c.l.b16 %v143
  %v311 = vunpack.c.l.b16 %v144
  %v312 = vunpack.c.l.b16 %v145
  %v313 = vunpack.c.l.b16 %v146
  %v314 = vunpack.c.l.b16 %v147
  %v315 = vunpack.c.l.b16 %v148
  %v316 = vunpack.c.l.b16 %v149
  %v317 = vunpack.c.l.b16 %v150
  %v318 = vunpack.c.l.b16 %v151
  %v319 = vunpack.c.l.b16 %v152
  %v320 = vunpack.c.l.b16 %v153
  %v321 = vunpack.c.l.b16 %v154
  %v322 = vunpack.c.l.b16 %v155
  %v323 = vunpack.c.l.b16 %v156
  %v324 = vunpack.c.l.b16 %v157
  %v325 = vunpack.c.l.b16 %v158
  %v326 = vunpack.c.l.b16 %v159
  %v327 = vunpack.c.l.b16 %v160
  %v328 = vunpack.c.l.b16 %v161
  %v329 = vunpack.c.l.b16 %v162
  %v330 = vunpack.c.l.b16 %v163
  %v331 = vunpack.c.l.b16 %v164
  %v332 = vunpack.c.l.b16 %v165
  %v333 = vunpack.c.l.b16 %v166
  %v334 = vunpack.c.l.b16 %v167
  %v335 = vunpack.c.l.b16 %v168
  %v336 = vunpack.c.l.b16 %v169
  %v337 = vunpack.c.l.b16 %v170
  %v338 = vunpack.c.l.b16 %v171
  %v339 = vunpack.c.l.b16 %v172
  %v340 = vunpack.c.l.b16 %v173
  %v341 = vunpack.c.l.b16 %v174
  %v342 = vunpack.c.l.b16 %v175
  %v343 = vunpack.c.l.b16 %v176
  %v344 = vunpack.c.l.b16 %v177
  %v345 = vunpack.c.l.b16 %v178
  %v346 = vunpack.c.l.b16 %v179
  %v347 = vunpack.c.l.b16 %v180
  %v348 = vunpack.c.l.b16 %v181
  %v349 = vunpack.c.l.b16 %v182
  %v350 = vunpack.c.l.b16 %v183
  %v351 = vunpack.c.l.b16 %v184
  %v352 = vpack.c.b16 %v273, %v272
  %v353 = vpack.c.b16 %v275, %v274
  %v354 = vpack.c.b16 %v277, %v276
  %v355 = vpack.c.b16 %v279, %v278
  %v356 = vpack.c.b16 %v281, %v280
  %v357 = vpack.c.b16 %v283, %v282
  %v358 = vpack.c.b16 %v285, %v284
  %v359 = vpack.c.b16 %v287, %v286
  %v360 = vpack.c.b16 %v289, %v288
  %v361 = vpack.c.b16 %v291, %v290
  %v362 = vpack.c.b16 %v293, %v292
  %v363 = vpack.c.b16 %v295, %v294
  %v364 = vpack.c.b16 %v297, %v296
  %v365 = vpack.c.b16 %v299, %v298
  %v366 = vpack.c.b16 %v301, %v300
  %v367 = vpack.c.b16 %v303, %v302
  %v368 = vpack.c.b16 %v305, %v304
  %v369 = vpack.c.b16 %v307, %v306
  %v370 = vpack.c.b16 %v309, %v308
  %v371 = vpack.c.b16 %v311, %v310
  %v372 = vpack.c.b16 %v313, %v312
  %v373 = vpack.c.b16 %v315, %v314
  %v374 = vpack.c.b16 %v317, %v316
  %v375 = vpack.c.b16 %v319, %v318
  %v376 = vpack.c.b16 %v321, %v320
  %v377 = vpack.c.b16 %v323, %v322
  %v378 = vpack.c.b16 %v325, %v324
  %v379 = vpack.c.b16 %v327, %v326
  %v380 = vpack.c.b16 %v329, %v328
  %v381 = vpack.c.b16 %v331, %v330
  %v382 = vpack.c.b16 %v333, %v332
  %v383 = vpack.c.b16 %v335, %v334
  %v384 = vpack.c.b16 %v337, %v336
  %v385 = vpack.c.b16 %v339, %v338
  %v386 = vpack.c.b16 %v341, %v340
  %v387 = vpack.c.b16 %v343, %v342
  %v388 = vpack.c.b16 %v345, %v344
  %v389 = vpack.c.b16 %v347, %v346
  %v390 = vpack.c.b16 %v349, %v348
  %v391 = vpack.c.b16 %v351, %v350
  %432 = vmatprep.subr.bf16.mxu0 0
  %433 = vmatpush1.bf16.msra.mxu0 %v352
  %434 = vmatprep.subr.bf16.mxu0 0
  %435 = vmatpush1.bf16.msra.mxu0 %v353
  %436 = vmatprep.subr.bf16.mxu0 0
  %437 = vmatpush1.bf16.msra.mxu0 %v354
  %438 = vmatprep.subr.bf16.mxu0 0
  %439 = vmatpush1.bf16.msra.mxu0 %v355
  %440 = vmatprep.subr.bf16.mxu0 0
  %441 = vmatpush1.bf16.msra.mxu0 %v356
  %442 = vmatprep.subr.bf16.mxu0 0
  %443 = vmatpush1.bf16.msra.mxu0 %v357
  %444 = vmatprep.subr.bf16.mxu0 0
  %445 = vmatpush1.bf16.msra.mxu0 %v358
  %446 = vmatprep.subr.bf16.mxu0 0
  %447 = vmatpush1.bf16.msra.mxu0 %v359
  %448 = vmatprep.subr.bf16.mxu0 0
  %449 = vmatpush1.bf16.msra.mxu0 %v360
  %450 = vmatprep.subr.bf16.mxu0 0
  %451 = vmatpush1.bf16.msra.mxu0 %v361
  %452 = vmatprep.subr.bf16.mxu0 0
  %453 = vmatpush1.bf16.msra.mxu0 %v362
  %454 = vmatprep.subr.bf16.mxu0 0
  %455 = vmatpush1.bf16.msra.mxu0 %v363
  %456 = vmatprep.subr.bf16.mxu0 0
  %457 = vmatpush1.bf16.msra.mxu0 %v364
  %458 = vmatprep.subr.bf16.mxu0 0
  %459 = vmatpush1.bf16.msra.mxu0 %v365
  %460 = vmatprep.subr.bf16.mxu0 0
  %461 = vmatpush1.bf16.msra.mxu0 %v366
  %462 = vmatprep.subr.bf16.mxu0 0
  %463 = vmatpush1.bf16.msra.mxu0 %v367
  %464 = vmatprep.mubr.bf16.mxu0 %v51
  %465 = vmatmul.mubr.bf16.gmra.mrb[0].mxu0 %v29
  %v466 = vpop.f32.mrb[0].mxu0
  %v467 = vadd.f32 %v190, %v466
  %v468 = vpop.f32.mrb[0].mxu0
  %v469 = vpop.f32.mrb[0].mxu0
  %v470 = vadd.f32 %v190, %v469
  %v471 = vpop.f32.mrb[0].mxu0
  %472 = vmatprep.mubr.bf16.mxu0 %v63
  %473 = vmatmul.mubr.bf16.gmra.mrb[0].mxu0 %v30
  %v474 = vpop.f32.mrb[0].mxu0
  %v475 = vadd.f32 %v190, %v474
  %v476 = vpop.f32.mrb[0].mxu0
  %v477 = vpop.f32.mrb[0].mxu0
  %v478 = vadd.f32 %v190, %v477
  %v479 = vpop.f32.mrb[0].mxu0
  %480 = vdwg.mxu0
  %481 = vmatprep.subr.bf16.mxu0 0
  %482 = vmatpush1.bf16.msra.mxu0 %v368
  %483 = vmatprep.subr.bf16.mxu0 0
  %484 = vmatpush1.bf16.msra.mxu0 %v369
  %485 = vmatprep.subr.bf16.mxu0 0
  %486 = vmatpush1.bf16.msra.mxu0 %v370
  %487 = vmatprep.subr.bf16.mxu0 0
  %488 = vmatpush1.bf16.msra.mxu0 %v371
  %489 = vmatprep.subr.bf16.mxu0 0
  %490 = vmatpush1.bf16.msra.mxu0 %v372
  %491 = vmatprep.subr.bf16.mxu0 0
  %492 = vmatpush1.bf16.msra.mxu0 %v373
  %493 = vmatprep.subr.bf16.mxu0 0
  %494 = vmatpush1.bf16.msra.mxu0 %v374
  %495 = vmatprep.subr.bf16.mxu0 0
  %496 = vmatpush1.bf16.msra.mxu0 %v375
  %497 = vmatprep.subr.bf16.mxu0 0
  %498 = vmatpush1.bf16.msra.mxu0 %v376
  %499 = vmatprep.subr.bf16.mxu0 0
  %500 = vmatpush1.bf16.msra.mxu0 %v377
  %501 = vmatprep.subr.bf16.mxu0 0
  %502 = vmatpush1.bf16.msra.mxu0 %v378
  %503 = vmatprep.subr.bf16.mxu0 0
  %504 = vmatpush1.bf16.msra.mxu0 %v379
  %505 = vmatprep.subr.bf16.mxu0 0
  %506 = vmatpush1.bf16.msra.mxu0 %v380
  %507 = vmatprep.subr.bf16.mxu0 0
  %508 = vmatpush1.bf16.msra.mxu0 %v381
  %509 = vmatprep.subr.bf16.mxu0 0
  %510 = vmatpush1.bf16.msra.mxu0 %v382
  %511 = vmatprep.subr.bf16.mxu0 0
  %512 = vmatpush1.bf16.msra.mxu0 %v383
  %513 = vmatprep.mubr.bf16.mxu0 %v84
  %514 = vmatmul.mubr.bf16.gmra.mrb[0].mxu0 %v69
  %v515 = vpop.f32.mrb[0].mxu0
  %v516 = vadd.f32 %v467, %v515
  %v517 = vpop.f32.mrb[0].mxu0
  %v518 = vpop.f32.mrb[0].mxu0
  %v519 = vadd.f32 %v470, %v518
  %v520 = vpop.f32.mrb[0].mxu0
  %521 = vmatprep.mubr.bf16.mxu0 %v93
  %522 = vmatmul.mubr.bf16.gmra.mrb[0].mxu0 %v72
  %v523 = vpop.f32.mrb[0].mxu0
  %v524 = vadd.f32 %v475, %v523
  %v525 = vpop.f32.mrb[0].mxu0
  %v526 = vpop.f32.mrb[0].mxu0
  %v527 = vadd.f32 %v478, %v526
  %v528 = vpop.f32.mrb[0].mxu0
  %529 = vdwg.mxu0
  %530 = vmatprep.subr.bf16.mxu0 0
  %531 = vmatpush1.bf16.msra.mxu0 %v384
  %532 = vmatprep.subr.bf16.mxu0 0
  %533 = vmatpush1.bf16.msra.mxu0 %v385
  %534 = vmatprep.subr.bf16.mxu0 0
  %535 = vmatpush1.bf16.msra.mxu0 %v386
  %536 = vmatprep.subr.bf16.mxu0 0
  %537 = vmatpush1.bf16.msra.mxu0 %v387
  %538 = vmatprep.subr.bf16.mxu0 0
  %539 = vmatpush1.bf16.msra.mxu0 %v388
  %540 = vmatprep.subr.bf16.mxu0 0
  %541 = vmatpush1.bf16.msra.mxu0 %v389
  %542 = vmatprep.subr.bf16.mxu0 0
  %543 = vmatpush1.bf16.msra.mxu0 %v390
  %544 = vmatprep.subr.bf16.mxu0 0
  %545 = vmatpush1.bf16.msra.mxu0 %v391
  %546 = vmatprep.subr.bf16.mxu0 0
  %547 = vmatpush1.bf16.msra.mxu0 0
  %548 = vmatprep.subr.bf16.mxu0 0
  %549 = vmatpush1.bf16.msra.mxu0 0
  %550 = vmatprep.subr.bf16.mxu0 0
  %551 = vmatpush1.bf16.msra.mxu0 0
  %552 = vmatprep.subr.bf16.mxu0 0
  %553 = vmatpush1.bf16.msra.mxu0 0
  %554 = vmatprep.subr.bf16.mxu0 0
  %555 = vmatpush1.bf16.msra.mxu0 0
  %556 = vmatprep.subr.bf16.mxu0 0
  %557 = vmatpush1.bf16.msra.mxu0 0
  %558 = vmatprep.subr.bf16.mxu0 0
  %559 = vmatpush1.bf16.msra.mxu0 0
  %560 = vmatprep.subr.bf16.mxu0 0
  %561 = vmatpush1.bf16.msra.mxu0 0
  %562 = vmatprep.mubr.bf16.mxu0 0
  %563 = vmatmul.mubr.bf16.gmra.mrb[0].mxu0 %v99
  %v564 = vpop.f32.mrb[0].mxu0
  %v565 = vadd.f32 %v516, %v564
  %v566 = vpop.f32.mrb[0].mxu0
  %v567 = vpop.f32.mrb[0].mxu0
  %v568 = vadd.f32 %v519, %v567
  %v569 = vpop.f32.mrb[0].mxu0
  %570 = vmatprep.mubr.bf16.mxu0 0
  %571 = vmatmul.mubr.bf16.gmra.mrb[0].mxu0 %v102
  %v572 = vpop.f32.mrb[0].mxu0
  %v573 = vadd.f32 %v524, %v572
  %v574 = vpop.f32.mrb[0].mxu0
  %v575 = vpop.f32.mrb[0].mxu0
  %v576 = vadd.f32 %v527, %v575
  %v577 = vpop.f32.mrb[0].mxu0
  %578 = vdwg.mxu0
  %579 = vst [vmem:[%s3] sm:$0xff] %v565
  %580 = vst [vmem:[%s3 + $0x8] sm:$0xff] %v568
  %581 = vst [vmem:[%s3 + $0x10] sm:$0xff] %v573
  %582 = vst [vmem:[%s3 + $0x18] sm:$0xff] %v576
  // Predicated region
  $region14: #{conv_block_forward.1} parent=0 // pred_check
    _
  $region15: #{conv_block_forward.1} parent=0 // pred_check_branch
    %584 = sbr.rel (0) target = $region17
  $region16: #{conv_block_forward.1} parent=0 // pred_region
    _
  $region17: #{conv_block_forward.1} parent=0 // pred_fallthru
    _
  // Predicated region
  $region18: #{conv_block_forward.1} parent=0 // pred_check
    _
  $region19: #{conv_block_forward.1} parent=0 // pred_check_branch
    %586 = sbr.rel (0) target = $region21
  $region20: #{conv_block_forward.1} parent=0 // pred_region
    _
  $region21: #{conv_block_forward.1} parent=0 // pred_fallthru
    _

</llo_original>
